<compile_context>
chip_gen: v6e
topology: v6e:2x2x1
jax: 0.10.0
libtpu: 0.0.40
codegen_flags: <defaults>
</compile_context>

<pallas_src>
import jax
import jax.numpy as jnp
import numpy as np
from jax import lax
from jax.experimental import pallas as pl
from jax.experimental.pallas import tpu as pltpu


def _make_lstm_classifier_kernel(T, N, E, H):
    def kernel(x2_ref, wih_ref, whh_ref, b_ref, wout_ref, bout_ref, out_ref):
        # x2_ref:   (T*N, E)  time-major embedded sequence, flattened over (T, N)
        # wih_ref:  (E, 4H)   weight_ih_l0.T   (gate order i, f, g, o)
        # whh_ref:  (H, 4H)   weight_hh_l0.T
        # b_ref:    (1, 4H)   bias_ih_l0 + bias_hh_l0
        # wout_ref: (1, H)    output_layer.weight
        # bout_ref: (1, 1)    output_layer.bias
        # out_ref:  (1, T)    lane-dense sigmoid scores (wrapper reshapes to (T, 1))

        # Loop-invariant loads hoisted out of the recurrence.
        wih = wih_ref[...]
        whh = whh_ref[...]
        b = b_ref[...]
        wout_row = wout_ref[...]
        bout = bout_ref[...]

        # Input projection hoisted off the serial critical path:
        # one (T*N, E) @ (E, 4H) matmul with the bias folded in.
        xg = jnp.dot(x2_ref[...], wih, preferred_element_type=jnp.float32) + b

        h = jnp.zeros((N, H), jnp.float32)
        c = jnp.zeros((N, H), jnp.float32)

        score_row = jnp.zeros((1, T), jnp.float32)
        lane_ids = lax.broadcasted_iota(jnp.int32, (1, T), 1)

        # T is small & static -> fully unrolled recurrence (static slices, LLO gets
        # cross-step visibility to overlap MXU / VPU / EUP work).
        # TODO(synk): for long sequences switch to a time-chunked grid over T with
        # h/c carried in VMEM scratch so the x-chunk DMA pipelines behind compute.
        for t in range(T):
            gates = xg[t * N:(t + 1) * N, :] + jnp.dot(
                h, whh, preferred_element_type=jnp.float32)          # (N, 4H)
            i_g = jax.nn.sigmoid(gates[:, 0 * H:1 * H])
            f_g = jax.nn.sigmoid(gates[:, 1 * H:2 * H])
            g_g = jnp.tanh(gates[:, 2 * H:3 * H])
            o_g = jax.nn.sigmoid(gates[:, 3 * H:4 * H])
            c = f_g * c + i_g * g_g
            h = o_g * jnp.tanh(c)
            # output_rnn[:, -1, :] -> hidden state of batch column N-1 at step t.
            # Classifier score accumulated online (no trajectory buffer, no
            # per-step masked sub-tile store).
            s_t = jnp.sum(h[N - 1:N, :] * wout_row, axis=1, keepdims=True)  # (1, 1)
            score_row = score_row + jnp.where(lane_ids == t, s_t, 0.0)

        out_ref[...] = jax.nn.sigmoid(score_row + bout)               # (1, T)

    return kernel


def sentiment_classifier_forward(inputs_BL, params):
    # Embedding lookup is glue (gather) in plain JAX.
    emb = jnp.take(params["embedding"], inputs_BL, axis=0)   # (B, L, E) float32
    T, N, E = emb.shape                                      # T=B (time), N=L ("batch")
    H = params["whh_t"].shape[0]
    G = 4 * H
    x2d = emb.reshape(T * N, E)                              # flatten (T, N) for one big matmul

    kernel = _make_lstm_classifier_kernel(T, N, E, H)

    grid_spec = pltpu.PrefetchScalarGridSpec(
        num_scalar_prefetch=0,
        grid=(1,),
        in_specs=[
            pl.BlockSpec((T * N, E), lambda i: (0, 0)),
            pl.BlockSpec((E, G), lambda i: (0, 0)),
            pl.BlockSpec((H, G), lambda i: (0, 0)),
            pl.BlockSpec((1, G), lambda i: (0, 0)),
            pl.BlockSpec((1, H), lambda i: (0, 0)),
            pl.BlockSpec((1, 1), lambda i: (0, 0)),
        ],
        out_specs=pl.BlockSpec((1, T), lambda i: (0, 0)),
    )

    out_1T = pl.pallas_call(
        kernel,
        out_shape=jax.ShapeDtypeStruct((1, T), jnp.float32),
        grid_spec=grid_spec,
        compiler_params=pltpu.CompilerParams(dimension_semantics=("arbitrary",)),
    )(x2d, params["wih_t"], params["whh_t"], params["bias"],
      params["wout_row"], params["bout"])
    return out_1T.reshape(T, 1)                               # (B, 1) like the module


def init_params(key, vocab_size, E, H):
    # Deterministic synthetic parameters (PyTorch-like init scales).
    k1, k2, k3, k4, k5, k6, k7 = jax.random.split(key, 7)
    s = 1.0 / np.sqrt(H)
    embedding = jax.random.normal(k1, (vocab_size, E), jnp.float32)
    w_ih = jax.random.uniform(k2, (4 * H, E), jnp.float32, -s, s)
    w_hh = jax.random.uniform(k3, (4 * H, H), jnp.float32, -s, s)
    b_ih = jax.random.uniform(k4, (4 * H,), jnp.float32, -s, s)
    b_hh = jax.random.uniform(k5, (4 * H,), jnp.float32, -s, s)
    w_out = jax.random.uniform(k6, (1, H), jnp.float32, -s, s)
    b_out = jax.random.uniform(k7, (1,), jnp.float32, -s, s)
    return {
        "embedding": embedding,
        "wih_t": w_ih.T,                        # (E, 4H)
        "whh_t": w_hh.T,                        # (H, 4H)
        "bias": (b_ih + b_hh).reshape(1, 4 * H),
        "wout_row": w_out,                      # (1, H)
        "bout": b_out.reshape(1, 1),
    }


def reference_forward(inputs_BL, params):
    # Pure-JAX reference replicating the PyTorch forward exactly.
    emb = jnp.take(params["embedding"], inputs_BL, axis=0)    # (T, N, E) in LSTM view
    T, N, E = emb.shape
    H = params["whh_t"].shape[0]

    def cell(carry, x_t):
        h, c = carry
        gates = x_t @ params["wih_t"] + h @ params["whh_t"] + params["bias"]
        i_g = jax.nn.sigmoid(gates[:, :H])
        f_g = jax.nn.sigmoid(gates[:, H:2 * H])
        g_g = jnp.tanh(gates[:, 2 * H:3 * H])
        o_g = jax.nn.sigmoid(gates[:, 3 * H:])
        c = f_g * c + i_g * g_g
        h = o_g * jnp.tanh(c)
        return (h, c), h

    init = (jnp.zeros((N, H), jnp.float32), jnp.zeros((N, H), jnp.float32))
    _, hs = lax.scan(cell, init, emb)                         # (T, N, H)
    last = hs[:, -1, :]                                       # output_rnn[:, -1, :]
    return jax.nn.sigmoid(last @ params["wout_row"].T + params["bout"])


if __name__ == "__main__":
    # TODO(synk): multi-layer / bidirectional LSTM variants not exercised
    # (hyperparameters chosen with lstm_n_layers=1, lstm_bidirectional=False;
    #  dropout is therefore inactive exactly as in the PyTorch module).
    hyperparameters = {
        "embed_dim": 32,
        "hidden_dim": 32,
        "lstm_n_layers": 1,
        "lstm_bidirectional": False,
        "lstm_dropout_rate": 0.0,
    }
    vocab_size = 50
    B, L = 2, 8

    key = jax.random.PRNGKey(0)
    pkey, ikey = jax.random.split(key)
    params = init_params(pkey, vocab_size,
                         hyperparameters["embed_dim"], hyperparameters["hidden_dim"])
    inputs_BL = jax.random.randint(ikey, (B, L), 0, vocab_size, dtype=jnp.int32)

    out = sentiment_classifier_forward(inputs_BL, params)
    out = jax.block_until_ready(out)

    ref = reference_forward(inputs_BL, params)
    assert out.shape == (B, 1) and out.dtype == jnp.float32
    np.testing.assert_allclose(np.asarray(out), np.asarray(ref), atol=1e-3, rtol=1e-3)

    print("KERNEL_OK")
</pallas_src>

<mosaic_0001>
module attributes {stable_mosaic.version = 11 : i64} {
  func.func @kernel(%arg0: i32, %arg1: memref<16x32xf32, #tpu.memory_space<vmem>>, %arg2: memref<32x128xf32, #tpu.memory_space<vmem>>, %arg3: memref<32x128xf32, #tpu.memory_space<vmem>>, %arg4: memref<1x128xf32, #tpu.memory_space<vmem>>, %arg5: memref<1x32xf32, #tpu.memory_space<vmem>>, %arg6: memref<1x1xf32, #tpu.memory_space<vmem>>, %arg7: memref<1x2xf32, #tpu.memory_space<vmem>>) attributes {dimension_semantics = [#tpu.dimension_semantics<arbitrary>], iteration_bounds = array<i64: 1>, scalar_prefetch = 0 : i64, scratch_operands = 0 : i64, tpu.core_type = #tpu.core_type<tc>, window_params = [{pipeline_mode = #tpu.pipeline_mode<synchronous>, transform_indices = @transform_0, window_bounds = array<i64: 16, 32>}, {pipeline_mode = #tpu.pipeline_mode<synchronous>, transform_indices = @transform_1, window_bounds = array<i64: 32, 128>}, {pipeline_mode = #tpu.pipeline_mode<synchronous>, transform_indices = @transform_2, window_bounds = array<i64: 32, 128>}, {pipeline_mode = #tpu.pipeline_mode<synchronous>, transform_indices = @transform_3, window_bounds = array<i64: 1, 128>}, {pipeline_mode = #tpu.pipeline_mode<synchronous>, transform_indices = @transform_4, window_bounds = array<i64: 1, 32>}, {pipeline_mode = #tpu.pipeline_mode<synchronous>, transform_indices = @transform_5, window_bounds = array<i64: 1, 1>}, {pipeline_mode = #tpu.pipeline_mode<synchronous>, transform_indices = @transform_6, window_bounds = array<i64: 1, 2>}]} {
    %c0 = arith.constant 0 : index
    %c0_0 = arith.constant 0 : index
    %0 = vector.load %arg2[%c0, %c0_0] : memref<32x128xf32, #tpu.memory_space<vmem>>, vector<32x128xf32>
    %c0_1 = arith.constant 0 : index
    %c0_2 = arith.constant 0 : index
    %1 = vector.load %arg3[%c0_1, %c0_2] : memref<32x128xf32, #tpu.memory_space<vmem>>, vector<32x128xf32>
    %c0_3 = arith.constant 0 : index
    %c0_4 = arith.constant 0 : index
    %2 = vector.load %arg4[%c0_3, %c0_4] : memref<1x128xf32, #tpu.memory_space<vmem>>, vector<1x128xf32>
    %c0_5 = arith.constant 0 : index
    %c0_6 = arith.constant 0 : index
    %3 = vector.load %arg5[%c0_5, %c0_6] : memref<1x32xf32, #tpu.memory_space<vmem>>, vector<1x32xf32>
    %c0_7 = arith.constant 0 : index
    %c0_8 = arith.constant 0 : index
    %4 = vector.load %arg6[%c0_7, %c0_8] : memref<1x1xf32, #tpu.memory_space<vmem>>, vector<1x1xf32>
    %c0_9 = arith.constant 0 : index
    %c0_10 = arith.constant 0 : index
    %5 = vector.load %arg1[%c0_9, %c0_10] : memref<16x32xf32, #tpu.memory_space<vmem>>, vector<16x32xf32>
    %cst = arith.constant dense<0.000000e+00> : vector<16x128xf32>
    %6 = tpu.matmul %5, %0, %cst {dimension_numbers = #tpu.dot_dimension_numbers<[1], [0], [0], [1], [0, 0, 1, 1], [], []>} : vector<16x32xf32>, vector<32x128xf32>, vector<16x128xf32> -> vector<16x128xf32>
    %7 = vector.broadcast %2 : vector<1x128xf32> to vector<16x128xf32>
    %8 = arith.addf %6, %7 : vector<16x128xf32>
    %cst_11 = arith.constant 0.000000e+00 : f32
    %9 = vector.broadcast %cst_11 : f32 to vector<8x32xf32>
    %cst_12 = arith.constant 0.000000e+00 : f32
    %10 = vector.broadcast %cst_12 : f32 to vector<8x32xf32>
    %cst_13 = arith.constant 0.000000e+00 : f32
    %11 = vector.broadcast %cst_13 : f32 to vector<1x2xf32>
    %12 = tpu.iota {dimensions = array<i32: 1>} : vector<1x2xi32>
    %13 = vector.extract_strided_slice %8 {offsets = [0, 0], sizes = [8, 128], strides = [1, 1]} : vector<16x128xf32> to vector<8x128xf32>
    %cst_14 = arith.constant dense<0.000000e+00> : vector<8x128xf32>
    %14 = tpu.matmul %9, %1, %cst_14 {dimension_numbers = #tpu.dot_dimension_numbers<[1], [0], [0], [1], [0, 0, 1, 1], [], []>} : vector<8x32xf32>, vector<32x128xf32>, vector<8x128xf32> -> vector<8x128xf32>
    %15 = arith.addf %13, %14 : vector<8x128xf32>
    %16 = vector.extract_strided_slice %15 {offsets = [0, 0], sizes = [8, 32], strides = [1, 1]} : vector<8x128xf32> to vector<8x32xf32>
    %17 = arith.negf %16 : vector<8x32xf32>
    %18 = math.exp %17 : vector<8x32xf32>
    %cst_15 = arith.constant 1.000000e+00 : f32
    %19 = vector.broadcast %cst_15 : f32 to vector<8x32xf32>
    %20 = arith.addf %19, %18 : vector<8x32xf32>
    %21 = arith.divf %19, %20 : vector<8x32xf32>
    %22 = vector.extract_strided_slice %15 {offsets = [0, 32], sizes = [8, 32], strides = [1, 1]} : vector<8x128xf32> to vector<8x32xf32>
    %23 = arith.negf %22 : vector<8x32xf32>
    %24 = math.exp %23 : vector<8x32xf32>
    %cst_16 = arith.constant 1.000000e+00 : f32
    %25 = vector.broadcast %cst_16 : f32 to vector<8x32xf32>
    %26 = arith.addf %25, %24 : vector<8x32xf32>
    %27 = arith.divf %25, %26 : vector<8x32xf32>
    %28 = vector.extract_strided_slice %15 {offsets = [0, 64], sizes = [8, 32], strides = [1, 1]} : vector<8x128xf32> to vector<8x32xf32>
    %29 = math.tanh %28 : vector<8x32xf32>
    %30 = vector.extract_strided_slice %15 {offsets = [0, 96], sizes = [8, 32], strides = [1, 1]} : vector<8x128xf32> to vector<8x32xf32>
    %31 = arith.negf %30 : vector<8x32xf32>
    %32 = math.exp %31 : vector<8x32xf32>
    %cst_17 = arith.constant 1.000000e+00 : f32
    %33 = vector.broadcast %cst_17 : f32 to vector<8x32xf32>
    %34 = arith.addf %33, %32 : vector<8x32xf32>
    %35 = arith.divf %33, %34 : vector<8x32xf32>
    %36 = arith.mulf %27, %10 : vector<8x32xf32>
    %37 = arith.mulf %21, %29 : vector<8x32xf32>
    %38 = arith.addf %36, %37 : vector<8x32xf32>
    %39 = math.tanh %38 : vector<8x32xf32>
    %40 = arith.mulf %35, %39 : vector<8x32xf32>
    %41 = vector.extract_strided_slice %40 {offsets = [7, 0], sizes = [1, 32], strides = [1, 1]} : vector<8x32xf32> to vector<1x32xf32>
    %42 = arith.mulf %41, %3 : vector<1x32xf32>
    %cst_18 = arith.constant dense<0.000000e+00> : vector<1xf32>
    %43 = vector.multi_reduction <add>, %42, %cst_18 [1] : vector<1x32xf32> to vector<1xf32>
    %44 = vector.shape_cast %43 : vector<1xf32> to vector<1x1xf32>
    %c0_i32 = arith.constant 0 : i32
    %45 = vector.broadcast %c0_i32 : i32 to vector<1x2xi32>
    %46 = arith.cmpi eq, %12, %45 : vector<1x2xi32>
    %cst_19 = arith.constant 0.000000e+00 : f32
    %47 = vector.shape_cast %44 : vector<1x1xf32> to vector<1x1xf32>
    %48 = vector.broadcast %47 : vector<1x1xf32> to vector<1x2xf32>
    %49 = vector.broadcast %cst_19 : f32 to vector<1x2xf32>
    %50 = arith.select %46, %48, %49 : vector<1x2xi1>, vector<1x2xf32>
    %51 = arith.addf %11, %50 : vector<1x2xf32>
    %52 = vector.extract_strided_slice %8 {offsets = [8, 0], sizes = [8, 128], strides = [1, 1]} : vector<16x128xf32> to vector<8x128xf32>
    %cst_20 = arith.constant dense<0.000000e+00> : vector<8x128xf32>
    %53 = tpu.matmul %40, %1, %cst_20 {dimension_numbers = #tpu.dot_dimension_numbers<[1], [0], [0], [1], [0, 0, 1, 1], [], []>} : vector<8x32xf32>, vector<32x128xf32>, vector<8x128xf32> -> vector<8x128xf32>
    %54 = arith.addf %52, %53 : vector<8x128xf32>
    %55 = vector.extract_strided_slice %54 {offsets = [0, 0], sizes = [8, 32], strides = [1, 1]} : vector<8x128xf32> to vector<8x32xf32>
    %56 = arith.negf %55 : vector<8x32xf32>
    %57 = math.exp %56 : vector<8x32xf32>
    %cst_21 = arith.constant 1.000000e+00 : f32
    %58 = vector.broadcast %cst_21 : f32 to vector<8x32xf32>
    %59 = arith.addf %58, %57 : vector<8x32xf32>
    %60 = arith.divf %58, %59 : vector<8x32xf32>
    %61 = vector.extract_strided_slice %54 {offsets = [0, 32], sizes = [8, 32], strides = [1, 1]} : vector<8x128xf32> to vector<8x32xf32>
    %62 = arith.negf %61 : vector<8x32xf32>
    %63 = math.exp %62 : vector<8x32xf32>
    %cst_22 = arith.constant 1.000000e+00 : f32
    %64 = vector.broadcast %cst_22 : f32 to vector<8x32xf32>
    %65 = arith.addf %64, %63 : vector<8x32xf32>
    %66 = arith.divf %64, %65 : vector<8x32xf32>
    %67 = vector.extract_strided_slice %54 {offsets = [0, 64], sizes = [8, 32], strides = [1, 1]} : vector<8x128xf32> to vector<8x32xf32>
    %68 = math.tanh %67 : vector<8x32xf32>
    %69 = vector.extract_strided_slice %54 {offsets = [0, 96], sizes = [8, 32], strides = [1, 1]} : vector<8x128xf32> to vector<8x32xf32>
    %70 = arith.negf %69 : vector<8x32xf32>
    %71 = math.exp %70 : vector<8x32xf32>
    %cst_23 = arith.constant 1.000000e+00 : f32
    %72 = vector.broadcast %cst_23 : f32 to vector<8x32xf32>
    %73 = arith.addf %72, %71 : vector<8x32xf32>
    %74 = arith.divf %72, %73 : vector<8x32xf32>
    %75 = arith.mulf %66, %38 : vector<8x32xf32>
    %76 = arith.mulf %60, %68 : vector<8x32xf32>
    %77 = arith.addf %75, %76 : vector<8x32xf32>
    %78 = math.tanh %77 : vector<8x32xf32>
    %79 = arith.mulf %74, %78 : vector<8x32xf32>
    %80 = vector.extract_strided_slice %79 {offsets = [7, 0], sizes = [1, 32], strides = [1, 1]} : vector<8x32xf32> to vector<1x32xf32>
    %81 = arith.mulf %80, %3 : vector<1x32xf32>
    %cst_24 = arith.constant dense<0.000000e+00> : vector<1xf32>
    %82 = vector.multi_reduction <add>, %81, %cst_24 [1] : vector<1x32xf32> to vector<1xf32>
    %83 = vector.shape_cast %82 : vector<1xf32> to vector<1x1xf32>
    %c1_i32 = arith.constant 1 : i32
    %84 = vector.broadcast %c1_i32 : i32 to vector<1x2xi32>
    %85 = arith.cmpi eq, %12, %84 : vector<1x2xi32>
    %cst_25 = arith.constant 0.000000e+00 : f32
    %86 = vector.shape_cast %83 : vector<1x1xf32> to vector<1x1xf32>
    %87 = vector.broadcast %86 : vector<1x1xf32> to vector<1x2xf32>
    %88 = vector.broadcast %cst_25 : f32 to vector<1x2xf32>
    %89 = arith.select %85, %87, %88 : vector<1x2xi1>, vector<1x2xf32>
    %90 = arith.addf %51, %89 : vector<1x2xf32>
    %91 = vector.broadcast %4 : vector<1x1xf32> to vector<1x2xf32>
    %92 = arith.addf %90, %91 : vector<1x2xf32>
    %93 = arith.negf %92 : vector<1x2xf32>
    %94 = math.exp %93 : vector<1x2xf32>
    %cst_26 = arith.constant 1.000000e+00 : f32
    %95 = vector.broadcast %cst_26 : f32 to vector<1x2xf32>
    %96 = arith.addf %95, %94 : vector<1x2xf32>
    %97 = arith.divf %95, %96 : vector<1x2xf32>
    %c0_27 = arith.constant 0 : index
    %c0_28 = arith.constant 0 : index
    %98 = vector.load %arg7[%c0_27, %c0_28] : memref<1x2xf32, #tpu.memory_space<vmem>>, vector<1x2xf32>
    tpu.vector_store %arg7[%c0_27, %c0_28], %97 {strides = array<i32>} : memref<1x2xf32, #tpu.memory_space<vmem>>, vector<1x2xf32>,
    return
  }
  func.func @transform_0(%arg0: i32) -> (i32, i32) {
    %c0_i32 = arith.constant 0 : i32
    %c0_i32_0 = arith.constant 0 : i32
    %c0_i32_1 = arith.constant 0 : i32
    return %c0_i32, %c0_i32_0 : i32, i32
  }
  func.func @transform_1(%arg0: i32) -> (i32, i32) {
    %c0_i32 = arith.constant 0 : i32
    %c0_i32_0 = arith.constant 0 : i32
    %c0_i32_1 = arith.constant 0 : i32
    return %c0_i32, %c0_i32_0 : i32, i32
  }
  func.func @transform_2(%arg0: i32) -> (i32, i32) {
    %c0_i32 = arith.constant 0 : i32
    %c0_i32_0 = arith.constant 0 : i32
    %c0_i32_1 = arith.constant 0 : i32
    return %c0_i32, %c0_i32_0 : i32, i32
  }
  func.func @transform_3(%arg0: i32) -> (i32, i32) {
    %c0_i32 = arith.constant 0 : i32
    %c0_i32_0 = arith.constant 0 : i32
    %c0_i32_1 = arith.constant 0 : i32
    return %c0_i32, %c0_i32_0 : i32, i32
  }
  func.func @transform_4(%arg0: i32) -> (i32, i32) {
    %c0_i32 = arith.constant 0 : i32
    %c0_i32_0 = arith.constant 0 : i32
    %c0_i32_1 = arith.constant 0 : i32
    return %c0_i32, %c0_i32_0 : i32, i32
  }
  func.func @transform_5(%arg0: i32) -> (i32, i32) {
    %c0_i32 = arith.constant 0 : i32
    %c0_i32_0 = arith.constant 0 : i32
    %c0_i32_1 = arith.constant 0 : i32
    return %c0_i32, %c0_i32_0 : i32, i32
  }
  func.func @transform_6(%arg0: i32) -> (i32, i32) {
    %c0_i32 = arith.constant 0 : i32
    %c0_i32_0 = arith.constant 0 : i32
    %c0_i32_1 = arith.constant 0 : i32
    return %c0_i32, %c0_i32_0 : i32, i32
  }
}

</mosaic_0001>

<llo_original>
// kernel: tpu_custom_call.1
$region0: #{tpu_custom_call.1}
  #allocation0 [shape = 'u32[]', space=smem, size = 0x4, offset = 0x4, fixed_abs, tag = 'smem constant byte address 0x4 - core index']
  #allocation1 [shape = 'u32[144,128]{1,0:T(1,128)}', space=vmem, size = 0x12000, scoped, tag = 'internal scratch']
  #allocation2 [shape = 'f32[1,1]{1,0:T(1,128)S(1)}', space=vmem, size = 0x200, scoped, tag = 'scoped memory for tpu_custom_call.1']
  %s0 = inlined_call_operand.hbm [shape: f32[16,32], index: 0, kind: input, shape index: {}]
  %s1 = inlined_call_operand.hbm [shape: f32[32,128], index: 1, kind: input, shape index: {}]
  %s2 = inlined_call_operand.hbm [shape: f32[32,128], index: 2, kind: input, shape index: {}]
  %s3 = inlined_call_operand.vmem [shape: f32[1,128], index: 3, kind: input, shape index: {}]
  %s4 = inlined_call_operand.vmem [shape: f32[1,32], index: 4, kind: input, shape index: {}]
  %s5 = inlined_call_operand.<no memory space> [shape: f32[1,1], index: 5, kind: input, shape index: {}]
  %s6 = inlined_call_operand.hbm [shape: f32[1,2], index: 6, kind: output, shape index: {}]
  %s7 = sld [smem:[#allocation0]]
  $region46: #{tpu_custom_call.1} parent=0
    _
  %s9 = ssub.s32 1, %s7
  %s10 = scalar_select 0, %s9, %s7
  %v11 = vstv %s5
  %12 = vst [vmem:[#allocation2] sm:$0x1] %v11
  $region1: #{tpu_custom_call.1} parent=0
    #allocation3 [shape = 'u8[8192]{0}', space=vmem, size = 0x2000, scoped, tag = 'input window, operand 0, single buffered']
    #allocation4 [shape = 's32[1]{0}', space=sflag, size = 0x4, scoped, tag = 'scoped memory for tpu_custom_call.1']
    #allocation5 [shape = 's32[1]{0}', space=sflag, size = 0x4, scoped, tag = 'scoped memory for tpu_custom_call.1']
    #allocation6 [shape = 'u8[16384]{0}', space=vmem, size = 0x4000, scoped, tag = 'input window, operand 1, single buffered']
    #allocation7 [shape = 's32[1]{0}', space=sflag, size = 0x4, scoped, tag = 'scoped memory for tpu_custom_call.1']
    #allocation8 [shape = 'u8[16384]{0}', space=vmem, size = 0x4000, scoped, tag = 'input window, operand 2, single buffered']
    #allocation9 [shape = 'u8[512]{0}', space=vmem, size = 0x400, scoped, tag = 'output window, operand 0, single buffered']
    %13 = vsyncpa [#allocation4], 0
    %14 = vsyncpa [#allocation7], 0
    %15 = vsyncpa [#allocation5], 0
    // Predicated region
    $region2: #{tpu_custom_call.1} parent=1 // pred_check
      _
    $region3: #{tpu_custom_call.1} parent=1 // pred_check_branch
      %17 = sbr.rel (0) target = $region5
    $region4: #{tpu_custom_call.1} parent=1 // pred_region
      %s19 = ssub.s32 256, 256
      %20 = vsyncadd [#allocation4], %s19
      %s21 = sshll.u32 [#allocation3], 4
      %s22 = int_to_ptr.vmem [resolvable:$true] %s21
      %27 = dma.hbm_to_vmem [thread:$0]  %s0, 256, %s22, [#allocation4], 128, 128, 8
    $region5: #{tpu_custom_call.1} parent=1 // pred_fallthru
      _
    // Predicated region
    $region6: #{tpu_custom_call.1} parent=1 // pred_check
      _
    $region7: #{tpu_custom_call.1} parent=1 // pred_check_branch
      %29 = sbr.rel (0) target = $region9
    $region8: #{tpu_custom_call.1} parent=1 // pred_region
      %s31 = ssub.s32 512, 512
      %32 = vsyncadd [#allocation7], %s31
      %s33 = sshll.u32 [#allocation6], 4
      %s34 = int_to_ptr.vmem [resolvable:$true] %s33
      %39 = dma.hbm_to_vmem [thread:$0]  %s1, 512, %s34, [#allocation7], 128, 128, 8
    $region9: #{tpu_custom_call.1} parent=1 // pred_fallthru
      _
    // Predicated region
    $region10: #{tpu_custom_call.1} parent=1 // pred_check
      _
    $region11: #{tpu_custom_call.1} parent=1 // pred_check_branch
      %41 = sbr.rel (0) target = $region13
    $region12: #{tpu_custom_call.1} parent=1 // pred_region
      %s43 = ssub.s32 512, 512
      %44 = vsyncadd [#allocation7], %s43
      %s45 = sshll.u32 [#allocation8], 4
      %s46 = int_to_ptr.vmem [resolvable:$true] %s45
      %51 = dma.hbm_to_vmem [thread:$0]  %s2, 512, %s46, [#allocation7], 128, 128, 8
    $region13: #{tpu_custom_call.1} parent=1 // pred_fallthru
      _
    // Predicated region
    $region14: #{tpu_custom_call.1} parent=1 // pred_check
      _
    $region15: #{tpu_custom_call.1} parent=1 // pred_check_branch
      %53 = sbr.rel (0) target = $region17
    $region16: #{tpu_custom_call.1} parent=1 // pred_region
      _
    $region17: #{tpu_custom_call.1} parent=1 // pred_fallthru
      _
    // Predicated region
    $region18: #{tpu_custom_call.1} parent=1 // pred_check
      _
    $region19: #{tpu_custom_call.1} parent=1 // pred_check_branch
      %55 = sbr.rel (0) target = $region21
    $region20: #{tpu_custom_call.1} parent=1 // pred_region
      _
    $region21: #{tpu_custom_call.1} parent=1 // pred_fallthru
      _
    // Predicated region
    $region22: #{tpu_custom_call.1} parent=1 // pred_check
      _
    $region23: #{tpu_custom_call.1} parent=1 // pred_check_branch
      %57 = sbr.rel (0) target = $region25
    $region24: #{tpu_custom_call.1} parent=1 // pred_region
      _
    $region25: #{tpu_custom_call.1} parent=1 // pred_fallthru
      _
    // Predicated region
    $region26: #{tpu_custom_call.1} parent=1 // pred_check
      _
    $region27: #{tpu_custom_call.1} parent=1 // pred_check_branch
      %59 = sbr.rel (0) target = $region29
    $region28: #{tpu_custom_call.1} parent=1 // pred_region
      %60 = dma.done [#allocation4], 256
    $region29: #{tpu_custom_call.1} parent=1 // pred_fallthru
      _
    // Predicated region
    $region30: #{tpu_custom_call.1} parent=1 // pred_check
      _
    $region31: #{tpu_custom_call.1} parent=1 // pred_check_branch
      %62 = sbr.rel (0) target = $region33
    $region32: #{tpu_custom_call.1} parent=1 // pred_region
      %63 = dma.done [#allocation7], 512
    $region33: #{tpu_custom_call.1} parent=1 // pred_fallthru
      _
    // Predicated region
    $region34: #{tpu_custom_call.1} parent=1 // pred_check
      _
    $region35: #{tpu_custom_call.1} parent=1 // pred_check_branch
      %65 = sbr.rel (0) target = $region37
    $region36: #{tpu_custom_call.1} parent=1 // pred_region
      %66 = dma.done [#allocation7], 512
    $region37: #{tpu_custom_call.1} parent=1 // pred_fallthru
      _
    %v67 = vld [vmem:[#allocation6] sm:$0xff]
    %v68 = vld [vmem:[#allocation6 + $0x8] sm:$0xff]
    %v69 = vld [vmem:[#allocation6 + $0x10] sm:$0xff]
    %v70 = vld [vmem:[#allocation6 + $0x18] sm:$0xff]
    %v71 = vld [vmem:[#allocation8] sm:$0xff]
    %v72 = vld [vmem:[#allocation8 + $0x8] sm:$0xff]
    %v73 = vld [vmem:[#allocation8 + $0x10] sm:$0xff]
    %v74 = vld [vmem:[#allocation8 + $0x18] sm:$0xff]
    %v75 = vld [vmem:[%s3] sm:$0x1]
    %v76 = vld [vmem:[%s4] sm:$0x1]
    %v77 = vld [vmem:[#allocation2] sm:$0x1]
    %v78 = vld [vmem:[#allocation3] sm:$0xff]
    %v79 = vld [vmem:[#allocation3 + $0x8] sm:$0xff]
    %v81 = vlaneseq
    %v82 = vshrl.u32 %v81, 7
    %v83 = vsub.s32 0, %v82
    %v84 = vrot.slane %v75, %v83
    %vm86 = vcmask 261120
    %v88 = vsel %vm86, %v78, 0
    %v91 = vsel %vm86, %v79, 0
    %93 = vmatprep.subr.mxu0 0.0
    %94 = vmatpush1.msra.mxu0 0.0
    %95 = vmatprep.subr.mxu0 0.0
    %96 = vmatpush1.msra.mxu0 0.0
    %97 = vmatprep.subr.mxu0 0.0
    %98 = vmatpush1.msra.mxu0 0.0
    %99 = vmatprep.subr.mxu0 0.0
    %100 = vmatpush1.msra.mxu0 0.0
    %101 = vmatprep.subr.mxu0 0.0
    %102 = vmatpush1.msra.mxu0 0.0
    %103 = vmatprep.subr.mxu0 0.0
    %104 = vmatpush1.msra.mxu0 0.0
    %105 = vmatprep.subr.mxu0 0.0
    %106 = vmatpush1.msra.mxu0 0.0
    %107 = vmatprep.subr.mxu0 0.0
    %108 = vmatpush1.msra.mxu0 0.0
    %109 = vmatprep.subr.mxu0 0.0
    %110 = vmatpush1.msra.mxu0 0.0
    %111 = vmatprep.subr.mxu0 0.0
    %112 = vmatpush1.msra.mxu0 0.0
    %113 = vmatprep.subr.mxu0 0.0
    %114 = vmatpush1.msra.mxu0 0.0
    %115 = vmatprep.subr.mxu0 0.0
    %116 = vmatpush1.msra.mxu0 0.0
    %117 = vmatprep.subr.mxu0 0.0
    %118 = vmatpush1.msra.mxu0 %v70
    %119 = vmatprep.subr.mxu0 0.0
    %120 = vmatpush1.msra.mxu0 %v69
    %121 = vmatprep.subr.mxu0 0.0
    %122 = vmatpush1.msra.mxu0 %v68
    %123 = vmatprep.subr.mxu0 0.0
    %124 = vmatpush1.msra.mxu0 %v67
    %125 = vmatprep.subr.mxu0 0.0
    %126 = vmatpush2.msra.mxu0 0.0
    %127 = vmatprep.subr.mxu0 0.0
    %128 = vmatpush2.msra.mxu0 0.0
    %129 = vmatprep.subr.mxu0 0.0
    %130 = vmatpush2.msra.mxu0 0.0
    %131 = vmatprep.subr.mxu0 0.0
    %132 = vmatpush2.msra.mxu0 0.0
    %133 = vmatprep.subr.mxu0 0.0
    %134 = vmatpush2.msra.mxu0 0.0
    %135 = vmatprep.subr.mxu0 0.0
    %136 = vmatpush2.msra.mxu0 0.0
    %137 = vmatprep.subr.mxu0 0.0
    %138 = vmatpush2.msra.mxu0 0.0
    %139 = vmatprep.subr.mxu0 0.0
    %140 = vmatpush2.msra.mxu0 0.0
    %141 = vmatprep.subr.mxu0 0.0
    %142 = vmatpush2.msra.mxu0 0.0
    %143 = vmatprep.subr.mxu0 0.0
    %144 = vmatpush2.msra.mxu0 0.0
    %145 = vmatprep.subr.mxu0 0.0
    %146 = vmatpush2.msra.mxu0 0.0
    %147 = vmatprep.subr.mxu0 0.0
    %148 = vmatpush2.msra.mxu0 0.0
    %149 = vmatprep.subr.mxu0 0.0
    %150 = vmatpush2.msra.mxu0 0.0
    %151 = vmatprep.subr.mxu0 0.0
    %152 = vmatpush2.msra.mxu0 0.0
    %153 = vmatprep.subr.mxu0 0.0
    %154 = vmatpush2.msra.mxu0 0.0
    %155 = vmatprep.subr.mxu0 0.0
    %156 = vmatpush2.msra.mxu0 0.0
    %157 = vmatprep.mubr.f32.mxu0 0.0
    %158 = vmatmul.mubr.f32.gmra.mxu0 %v88
    %v159 = vpop.f32.mrf.mxu0
    %v160 = vadd.f32 %v84, %v159
    %v161 = vpop.f32.mrf.mxu0
    %162 = vmatprep.mubr.f32.mxu0 0.0
    %163 = vmatmul.mubr.f32.gmra.mxu0 %v91
    %v164 = vpop.f32.mrf.mxu0
    %v165 = vadd.f32 %v84, %v164
    %v166 = vpop.f32.mrf.mxu0
    %167 = vdwg.mxu0
    %v168 = vlaneseq
    %v169 = vand.u32 %v168, 127
    %v171 = vsel %vm86, 0.0, 0
    %173 = vmatprep.subr.mxu0 0.0
    %174 = vmatpush1.msra.mxu0 0.0
    %175 = vmatprep.subr.mxu0 0.0
    %176 = vmatpush1.msra.mxu0 0.0
    %177 = vmatprep.subr.mxu0 0.0
    %178 = vmatpush1.msra.mxu0 0.0
    %179 = vmatprep.subr.mxu0 0.0
    %180 = vmatpush1.msra.mxu0 0.0
    %181 = vmatprep.subr.mxu0 0.0
    %182 = vmatpush1.msra.mxu0 0.0
    %183 = vmatprep.subr.mxu0 0.0
    %184 = vmatpush1.msra.mxu0 0.0
    %185 = vmatprep.subr.mxu0 0.0
    %186 = vmatpush1.msra.mxu0 0.0
    %187 = vmatprep.subr.mxu0 0.0
    %188 = vmatpush1.msra.mxu0 0.0
    %189 = vmatprep.subr.mxu0 0.0
    %190 = vmatpush1.msra.mxu0 0.0
    %191 = vmatprep.subr.mxu0 0.0
    %192 = vmatpush1.msra.mxu0 0.0
    %193 = vmatprep.subr.mxu0 0.0
    %194 = vmatpush1.msra.mxu0 0.0
    %195 = vmatprep.subr.mxu0 0.0
    %196 = vmatpush1.msra.mxu0 0.0
    %197 = vmatprep.subr.mxu0 0.0
    %198 = vmatpush1.msra.mxu0 %v74
    %199 = vmatprep.subr.mxu0 0.0
    %200 = vmatpush1.msra.mxu0 %v73
    %201 = vmatprep.subr.mxu0 0.0
    %202 = vmatpush1.msra.mxu0 %v72
    %203 = vmatprep.subr.mxu0 0.0
    %204 = vmatpush1.msra.mxu0 %v71
    %205 = vmatprep.subr.mxu0 0.0
    %206 = vmatpush2.msra.mxu0 0.0
    %207 = vmatprep.subr.mxu0 0.0
    %208 = vmatpush2.msra.mxu0 0.0
    %209 = vmatprep.subr.mxu0 0.0
    %210 = vmatpush2.msra.mxu0 0.0
    %211 = vmatprep.subr.mxu0 0.0
    %212 = vmatpush2.msra.mxu0 0.0
    %213 = vmatprep.subr.mxu0 0.0
    %214 = vmatpush2.msra.mxu0 0.0
    %215 = vmatprep.subr.mxu0 0.0
    %216 = vmatpush2.msra.mxu0 0.0
    %217 = vmatprep.subr.mxu0 0.0
    %218 = vmatpush2.msra.mxu0 0.0
    %219 = vmatprep.subr.mxu0 0.0
    %220 = vmatpush2.msra.mxu0 0.0
    %221 = vmatprep.subr.mxu0 0.0
    %222 = vmatpush2.msra.mxu0 0.0
    %223 = vmatprep.subr.mxu0 0.0
    %224 = vmatpush2.msra.mxu0 0.0
    %225 = vmatprep.subr.mxu0 0.0
    %226 = vmatpush2.msra.mxu0 0.0
    %227 = vmatprep.subr.mxu0 0.0
    %228 = vmatpush2.msra.mxu0 0.0
    %229 = vmatprep.subr.mxu0 0.0
    %230 = vmatpush2.msra.mxu0 0.0
    %231 = vmatprep.subr.mxu0 0.0
    %232 = vmatpush2.msra.mxu0 0.0
    %233 = vmatprep.subr.mxu0 0.0
    %234 = vmatpush2.msra.mxu0 0.0
    %235 = vmatprep.subr.mxu0 0.0
    %236 = vmatpush2.msra.mxu0 0.0
    %237 = vmatprep.mubr.f32.mxu0 0.0
    %238 = vmatmul.mubr.f32.gmra.mxu0 %v171
    %v239 = vpop.f32.mrf.mxu0
    %v240 = vadd.f32 0.0, %v239
    %v241 = vpop.f32.mrf.mxu0
    %242 = vdwg.mxu0
    %v243 = vadd.f32 %v160, %v240
    %v244 = vxor.u32 %v243, 2147483648
    %v245 = vmul.f32 %v244, 1.442695
    %v246 = vpow.pop %v245
    %v247 = vadd.f32 %v246, 1.0
    %v248 = vrcp.pop %v247
    %v249 = vmul.f32 1.0, %v248
    %v250 = vtanh.pop %v243
    %v251 = vmul.f32 %v249, 0.0
    %253 = vrot.lane.b32.xlu0 %v250, 64
    %v254 = vpop.permute.xlu0 %253
    %v256 = vmul.f32 %v249, %v254
    %258 = vrot.lane.b32.xlu0 %v256, 32
    %v259 = vpop.permute.xlu0 %258
    %v261 = vadd.f32 %v251, %v259
    %v262 = vtanh.pop %v261
    %264 = vrot.lane.b32.xlu0 %v262, 64
    %v265 = vpop.permute.xlu0 %264
    %v267 = vmul.f32 %v249, %v265
    %v269 = vlaneseq
    %v270 = vshrl.u32 %v269, 7
    %v271 = vsub.s32 0, %v270
    %v272 = vrot.slane %v76, %v271
    %273 = vrot.lane.b32.xlu0 %v272, 96
    %v274 = vpop.permute.xlu0 %273
    %v276 = vmul.f32 %v267, %v274
    %278 = vrot.lane.b32.xlu0 %v276, 32
    %v279 = vpop.permute.xlu0 %278
    %vm281 = vcmask 261127
    %v282 = vsel %vm281, %v279, 0.0
    %283 = vadd.xlane.f32.xlu0 %v282
    %v284 = vpop.xlane.xlu0 %283
    %vm285 = vcmp.eq.s32.totalorder %v169, 0
    %v286 = vsel %vm285, %v284, 0.0
    %v287 = vadd.f32 %v286, 0.0
    %289 = vrot.lane.b32.xlu0 %v267, 32
    %v290 = vpop.permute.xlu0 %289
    %v291 = vsel %vm86, %v290, 0
    %293 = vmatprep.subr.mxu0 0.0
    %294 = vmatpush1.msra.mxu0 0.0
    %295 = vmatprep.subr.mxu0 0.0
    %296 = vmatpush1.msra.mxu0 0.0
    %297 = vmatprep.subr.mxu0 0.0
    %298 = vmatpush1.msra.mxu0 0.0
    %299 = vmatprep.subr.mxu0 0.0
    %300 = vmatpush1.msra.mxu0 0.0
    %301 = vmatprep.subr.mxu0 0.0
    %302 = vmatpush1.msra.mxu0 0.0
    %303 = vmatprep.subr.mxu0 0.0
    %304 = vmatpush1.msra.mxu0 0.0
    %305 = vmatprep.subr.mxu0 0.0
    %306 = vmatpush1.msra.mxu0 0.0
    %307 = vmatprep.subr.mxu0 0.0
    %308 = vmatpush1.msra.mxu0 0.0
    %309 = vmatprep.subr.mxu0 0.0
    %310 = vmatpush1.msra.mxu0 0.0
    %311 = vmatprep.subr.mxu0 0.0
    %312 = vmatpush1.msra.mxu0 0.0
    %313 = vmatprep.subr.mxu0 0.0
    %314 = vmatpush1.msra.mxu0 0.0
    %315 = vmatprep.subr.mxu0 0.0
    %316 = vmatpush1.msra.mxu0 0.0
    %317 = vmatprep.subr.mxu0 0.0
    %318 = vmatpush1.msra.mxu0 %v74
    %319 = vmatprep.subr.mxu0 0.0
    %320 = vmatpush1.msra.mxu0 %v73
    %321 = vmatprep.subr.mxu0 0.0
    %322 = vmatpush1.msra.mxu0 %v72
    %323 = vmatprep.subr.mxu0 0.0
    %324 = vmatpush1.msra.mxu0 %v71
    %325 = vmatprep.subr.mxu0 0.0
    %326 = vmatpush2.msra.mxu0 0.0
    %327 = vmatprep.subr.mxu0 0.0
    %328 = vmatpush2.msra.mxu0 0.0
    %329 = vmatprep.subr.mxu0 0.0
    %330 = vmatpush2.msra.mxu0 0.0
    %331 = vmatprep.subr.mxu0 0.0
    %332 = vmatpush2.msra.mxu0 0.0
    %333 = vmatprep.subr.mxu0 0.0
    %334 = vmatpush2.msra.mxu0 0.0
    %335 = vmatprep.subr.mxu0 0.0
    %336 = vmatpush2.msra.mxu0 0.0
    %337 = vmatprep.subr.mxu0 0.0
    %338 = vmatpush2.msra.mxu0 0.0
    %339 = vmatprep.subr.mxu0 0.0
    %340 = vmatpush2.msra.mxu0 0.0
    %341 = vmatprep.subr.mxu0 0.0
    %342 = vmatpush2.msra.mxu0 0.0
    %343 = vmatprep.subr.mxu0 0.0
    %344 = vmatpush2.msra.mxu0 0.0
    %345 = vmatprep.subr.mxu0 0.0
    %346 = vmatpush2.msra.mxu0 0.0
    %347 = vmatprep.subr.mxu0 0.0
    %348 = vmatpush2.msra.mxu0 0.0
    %349 = vmatprep.subr.mxu0 0.0
    %350 = vmatpush2.msra.mxu0 0.0
    %351 = vmatprep.subr.mxu0 0.0
    %352 = vmatpush2.msra.mxu0 0.0
    %353 = vmatprep.subr.mxu0 0.0
    %354 = vmatpush2.msra.mxu0 0.0
    %355 = vmatprep.subr.mxu0 0.0
    %356 = vmatpush2.msra.mxu0 0.0
    %357 = vmatprep.mubr.f32.mxu0 0.0
    %358 = vmatmul.mubr.f32.gmra.mxu0 %v291
    %v359 = vpop.f32.mrf.mxu0
    %v360 = vadd.f32 0.0, %v359
    %v361 = vpop.f32.mrf.mxu0
    %362 = vdwg.mxu0
    %v363 = vadd.f32 %v165, %v360
    %v364 = vxor.u32 %v363, 2147483648
    %v365 = vmul.f32 %v364, 1.442695
    %v366 = vpow.pop %v365
    %v367 = vadd.f32 %v366, 1.0
    %v368 = vrcp.pop %v367
    %v369 = vmul.f32 1.0, %v368
    %v370 = vtanh.pop %v363
    %v371 = vmul.f32 %v369, %v261
    %373 = vrot.lane.b32.xlu0 %v370, 64
    %v374 = vpop.permute.xlu0 %373
    %v376 = vmul.f32 %v369, %v374
    %378 = vrot.lane.b32.xlu0 %v376, 32
    %v379 = vpop.permute.xlu0 %378
    %v381 = vadd.f32 %v371, %v379
    %v382 = vtanh.pop %v381
    %384 = vrot.lane.b32.xlu0 %v382, 64
    %v385 = vpop.permute.xlu0 %384
    %v387 = vmul.f32 %v369, %v385
    %v388 = vmul.f32 %v387, %v274
    %390 = vrot.lane.b32.xlu0 %v388, 32
    %v391 = vpop.permute.xlu0 %390
    %v393 = vsel %vm281, %v391, 0.0
    %394 = vadd.xlane.f32.xlu0 %v393
    %v395 = vpop.xlane.xlu0 %394
    %vm396 = vcmp.eq.s32.totalorder %v169, 1
    %v397 = vsel %vm396, %v395, 0.0
    %v398 = vadd.f32 %v287, %v397
    %400 = vset.pattern.permute.xlu0 0
    %401 = vperm.xlu0 %400, %v77
    %v402 = vpop.permute.xlu0 %401
    %v404 = vlaneseq
    %v405 = vshrl.u32 %v404, 7
    %v406 = vsub.s32 0, %v405
    %v407 = vrot.slane %v402, %v406
    %v408 = vadd.f32 %v398, %v407
    %v409 = vxor.u32 %v408, 2147483648
    %v410 = vmul.f32 %v409, 1.442695
    %v411 = vpow.pop %v410
    %v412 = vadd.f32 %v411, 1.0
    %v413 = vrcp.pop %v412
    %v414 = vmul.f32 1.0, %v413
    %vm415 = vcmask 15367
    %416 = vst.msk [vmem:[#allocation9 - $0x7] sm:$0x80] %vm415, %v414
    // Predicated region
    $region38: #{tpu_custom_call.1} parent=1 // pred_check
      _
    $region39: #{tpu_custom_call.1} parent=1 // pred_check_branch
      %418 = sbr.rel (0) target = $region41
    $region40: #{tpu_custom_call.1} parent=1 // pred_region
      %s420 = ssub.s32 16, 16
      %421 = vsyncadd [#allocation5], %s420
      %s423 = sshll.u32 [#allocation9], 4
      %s424 = int_to_ptr.vmem [resolvable:$true] %s423
      %426 = dma.vmem_to_hbm [thread:$0]  %s424, 16, %s6, [#allocation5]
    $region41: #{tpu_custom_call.1} parent=1 // pred_fallthru
      _
    // Predicated region
    $region42: #{tpu_custom_call.1} parent=1 // pred_check
      _
    $region43: #{tpu_custom_call.1} parent=1 // pred_check_branch
      %428 = sbr.rel (0) target = $region45
    $region44: #{tpu_custom_call.1} parent=1 // pred_region
      %429 = dma.done [#allocation5], 16
    $region45: #{tpu_custom_call.1} parent=1 // pred_fallthru
      _
    %430 = vsyncpa [#allocation4], 1
    %431 = vsyncpa [#allocation7], 1
    %432 = vsyncpa [#allocation5], 1

</llo_original>
